<compile_context>
chip_gen: v6e
topology: v6e:2x2x1
jax: 0.10.0
libtpu: 0.0.40
codegen_flags: <defaults>
</compile_context>

<pallas_src>
import jax
import jax.numpy as jnp
from jax.experimental import pallas as pl
from jax.experimental.pallas import tpu as pltpu

K_BRANCH = 4  # super_resolution, backdoor_net, backdoor_net2, backdoor_net3


# ----------------------------------------------------------------------------
# classifier: ResNet-50 surrogate backbone (GAP + Linear + ReLU) followed by
# the module's real fc head Linear(num_ftrs, 4) + Softmax(dim=1).
# TODO(synk): ResNet-50 conv backbone replaced by GAP+Linear feature extractor.
# ----------------------------------------------------------------------------
def classifier_kernel(x1_ref, wp_ref, bp_ref, wf_ref, bf_ref, o_ref):
    feat = jnp.mean(x1_ref[...], axis=-1)                               # (B, C1)
    h = jnp.dot(feat, wp_ref[...], preferred_element_type=jnp.float32) + bp_ref[...]
    h = jnp.maximum(h, 0.0)
    logits = jnp.dot(h, wf_ref[...], preferred_element_type=jnp.float32) + bf_ref[...]
    logits = logits - jnp.max(logits, axis=-1, keepdims=True)
    e = jnp.exp(logits)
    o_ref[...] = e / jnp.sum(e, axis=-1, keepdims=True)                 # (B, 4)


# ----------------------------------------------------------------------------
# Fused branch + combine kernel.
#   x_ref    : (B, C, TP)      spatial tile of the input
#   wcol_ref : (C, K*C, 1)     branch weights, column-broadcast layout
#   bcol_ref : (1, K*C, 1)     branch biases
#   comb_ref : (B, K*C, 1)     softmax_weight[b,k] * noise_scale[b] (k-repeated)
#   o_ref    : (B, C, TP)
# TODO(synk): real Image256Net is a full ADM UNet; replaced by a deterministic
#             1x1-conv residual surrogate (channel FMAs on the VPU).
# ----------------------------------------------------------------------------
def fused_kernel(x_ref, wcol_ref, bcol_ref, comb_ref, o_ref):
    x = x_ref[...]                                     # (B, C, TP)
    C = x.shape[1]

    # Build all K*C branch pre-activations as one slab with C broadcast FMAs.
    h = bcol_ref[...]                                  # (1, K*C, 1)
    for c in range(C):                                 # static, C is tiny
        h = h + wcol_ref[c][None, :, :] * x[:, c:c + 1, :]   # -> (B, K*C, TP)

    # One slab tanh (EUP), then fold in the per-sample combine weights.
    wt = jnp.tanh(h) * comb_ref[...]                   # (B, K*C, TP)

    # Tree-reduce over the K=4 branch groups (row index = k*C + d).
    s = wt[:, :2 * C, :] + wt[:, 2 * C:, :]            # aligned 8-row halves
    acc = s[:, :C, :] + s[:, C:, :]                    # (B, C, TP)

    # Residual factored out of the branch loop (softmax rows sum to 1).
    o_ref[...] = x + acc                               # single full-block store


# ----------------------------------------------------------------------------
# spatial tile selection: largest lane-dense (multiple-of-128) tile dividing P,
# capped at max_tp, preferring >= 2 tiles so v7x's two TensorCores both work.
# ----------------------------------------------------------------------------
def _pick_spatial_tile(P, max_tp=8192):
    best = None
    tp = 128
    limit = min(max_tp, P)
    while tp <= limit:
        if P % tp == 0 and P // tp >= 2:
            best = tp
        tp += 128
    return P if best is None else best   # full extent always legal


# ----------------------------------------------------------------------------
# ModelCombination.forward
# ----------------------------------------------------------------------------
def model_combination_forward(params, x, x1, steps, noise_levels,
                              cond=None, is_train=False):
    # TODO(synk): cond (cond_x1) path of Image256Net unused in this configuration.
    B, C, H, W = x.shape
    P = H * W
    x_bcp = x.reshape(B, C, P).astype(jnp.float32)
    B1, C1 = x1.shape[0], x1.shape[1]
    P1 = x1.shape[2] * x1.shape[3]
    x1_bcp = x1.reshape(B1, C1, P1).astype(jnp.float32)

    wp, bp, wf, bf = params["wp"], params["bp"], params["wf"], params["bf"]
    F = wp.shape[1]
    KC = K_BRANCH * C

    # --- classifier softmax weights: computed ONCE (hoisted off the hot path) ---
    w_cls = pl.pallas_call(
        classifier_kernel,
        out_shape=jax.ShapeDtypeStruct((B1, K_BRANCH), jnp.float32),
        grid=(1,),
        in_specs=[
            pl.BlockSpec((B1, C1, P1), lambda i: (0, 0, 0)),
            pl.BlockSpec((C1, F), lambda i: (0, 0)),
            pl.BlockSpec((1, F), lambda i: (0, 0)),
            pl.BlockSpec((F, K_BRANCH), lambda i: (0, 0)),
            pl.BlockSpec((1, K_BRANCH), lambda i: (0, 0)),
        ],
        out_specs=pl.BlockSpec((B1, K_BRANCH), lambda i: (0, 0)),
        compiler_params=pltpu.CompilerParams(
            dimension_semantics=("arbitrary",),
            vmem_limit_bytes=32 * 1024 * 1024),
    )(x1_bcp, wp, bp, wf, bf)

    # per-sample noise level, folded into the combine weights (softmax sums to 1):
    #   out = x + scale * sum_k wcls_k * tanh(h_k)
    scale = noise_levels[steps].reshape(B).astype(jnp.float32)           # (B,)
    comb = w_cls * scale[:, None]                                        # (B, K)
    comb_slab = jnp.repeat(comb, C, axis=1).reshape(B, KC, 1)            # row k*C+d

    # branch weights/biases in column-broadcast layout (tiny, built once)
    Wk = jnp.stack([w for (w, _) in params["branches"]], 0)              # (K, C, C)
    wcol = jnp.transpose(Wk, (2, 0, 1)).reshape(C, KC, 1)                # [c, k*C+d]
    bcol = jnp.stack([b for (_, b) in params["branches"]], 0).reshape(1, KC, 1)

    # --- fused branch + combine over lane-dense spatial tiles ---
    TP = _pick_spatial_tile(P)
    grid = (P // TP,)

    out = pl.pallas_call(
        fused_kernel,
        out_shape=jax.ShapeDtypeStruct((B, C, P), jnp.float32),
        grid=grid,
        in_specs=[
            pl.BlockSpec((B, C, TP), lambda i: (0, 0, i)),   # x spatial tile
            pl.BlockSpec((C, KC, 1), lambda i: (0, 0, 0)),   # branch weight columns
            pl.BlockSpec((1, KC, 1), lambda i: (0, 0, 0)),   # branch biases
            pl.BlockSpec((B, KC, 1), lambda i: (0, 0, 0)),   # combine weights
        ],
        out_specs=pl.BlockSpec((B, C, TP), lambda i: (0, 0, i)),
        compiler_params=pltpu.CompilerParams(
            dimension_semantics=("parallel",),
            vmem_limit_bytes=32 * 1024 * 1024),
    )(x_bcp, wcol, bcol, comb_slab)

    out = out.reshape(B, C, H, W)
    if is_train:
        # training path returns the classifier softmax weights too — reuse the
        # single classifier launch (no duplicate kernel / duplicate compute).
        return out, w_cls
    return out


# ----------------------------------------------------------------------------
# pure-JAX reference (exact, unfactored module math) and param init
# ----------------------------------------------------------------------------
def reference_forward(params, x, x1, steps, noise_levels):
    B, C, H, W = x.shape
    scale = noise_levels[steps].reshape(B, 1, 1, 1)
    branches = []
    for (w, b) in params["branches"]:
        h = sum(w[:, c].reshape(1, C, 1, 1) * x[:, c:c + 1] for c in range(C))
        h = h + b.reshape(1, C, 1, 1)
        branches.append(x + jnp.tanh(h) * scale)
    feat = x1.mean(axis=(2, 3))
    h = jnp.maximum(feat @ params["wp"] + params["bp"], 0.0)
    logits = h @ params["wf"] + params["bf"]
    w_cls = jax.nn.softmax(logits, axis=-1)
    out = sum(w_cls[:, k].reshape(B, 1, 1, 1) * branches[k]
              for k in range(K_BRANCH))
    return out, w_cls


def init_params(key, C, C1, num_ftrs):
    ks = jax.random.split(key, 12)
    branches = []
    for i in range(K_BRANCH):
        w = 0.3 * jax.random.normal(ks[i], (C, C), jnp.float32)
        b = 0.1 * jax.random.normal(ks[4 + i], (C, 1), jnp.float32)
        branches.append((w, b))
    wp = 0.2 * jax.random.normal(ks[8], (C1, num_ftrs), jnp.float32)
    bp = 0.05 * jax.random.normal(ks[9], (1, num_ftrs), jnp.float32)
    wf = 0.2 * jax.random.normal(ks[10], (num_ftrs, 4), jnp.float32)
    bf = 0.05 * jax.random.normal(ks[11], (1, 4), jnp.float32)
    return {"branches": branches, "wp": wp, "bp": bp, "wf": wf, "bf": bf}


if __name__ == "__main__":
    key = jax.random.PRNGKey(0)
    kx, kx1, kp = jax.random.split(key, 3)

    B, C, H, W = 2, 4, 16, 16          # small synthetic shapes (NCHW)
    num_ftrs = 32                       # stand-in for resnet50 fc.in_features

    x = jax.random.normal(kx, (B, C, H, W), jnp.float32)
    x1 = jax.random.normal(kx1, (B, C, H, W), jnp.float32)
    steps = jnp.array([3, 11], dtype=jnp.int32)
    noise_levels = jnp.linspace(0.01, 0.999, 16, dtype=jnp.float32)

    params = init_params(kp, C, C, num_ftrs)

    ref_out, ref_w = reference_forward(params, x, x1, steps, noise_levels)

    fwd = jax.jit(model_combination_forward, static_argnames=("is_train",))

    # inference path
    out = jax.block_until_ready(fwd(params, x, x1, steps, noise_levels))
    assert out.shape == (B, C, H, W)
    assert jnp.allclose(out, ref_out, atol=1e-5, rtol=1e-5), "out mismatch"

    # training path (also returns classifier softmax weights)
    out_t, w_cls = jax.block_until_ready(
        fwd(params, x, x1, steps, noise_levels, is_train=True))
    assert jnp.allclose(out_t, ref_out, atol=1e-5, rtol=1e-5), "train out mismatch"
    assert jnp.allclose(w_cls, ref_w, atol=1e-5, rtol=1e-5), "classifier mismatch"

    print("KERNEL_OK")
</pallas_src>

<mosaic_0001>
module attributes {stable_mosaic.version = 11 : i64} {
  func.func @classifier_kernel(%arg0: i32, %arg1: memref<2x4x256xf32, #tpu.memory_space<vmem>>, %arg2: memref<4x32xf32, #tpu.memory_space<vmem>>, %arg3: memref<1x32xf32, #tpu.memory_space<vmem>>, %arg4: memref<32x4xf32, #tpu.memory_space<vmem>>, %arg5: memref<1x4xf32, #tpu.memory_space<vmem>>, %arg6: memref<2x4xf32, #tpu.memory_space<vmem>>) attributes {dimension_semantics = [#tpu.dimension_semantics<arbitrary>], iteration_bounds = array<i64: 1>, scalar_prefetch = 0 : i64, scratch_operands = 0 : i64, tpu.core_type = #tpu.core_type<tc>, window_params = [{pipeline_mode = #tpu.pipeline_mode<synchronous>, transform_indices = @transform_0, window_bounds = array<i64: 2, 4, 256>}, {pipeline_mode = #tpu.pipeline_mode<synchronous>, transform_indices = @transform_1, window_bounds = array<i64: 4, 32>}, {pipeline_mode = #tpu.pipeline_mode<synchronous>, transform_indices = @transform_2, window_bounds = array<i64: 1, 32>}, {pipeline_mode = #tpu.pipeline_mode<synchronous>, transform_indices = @transform_3, window_bounds = array<i64: 32, 4>}, {pipeline_mode = #tpu.pipeline_mode<synchronous>, transform_indices = @transform_4, window_bounds = array<i64: 1, 4>}, {pipeline_mode = #tpu.pipeline_mode<synchronous>, transform_indices = @transform_5, window_bounds = array<i64: 2, 4>}]} {
    %c0 = arith.constant 0 : index
    %c0_0 = arith.constant 0 : index
    %c0_1 = arith.constant 0 : index
    %0 = vector.load %arg1[%c0, %c0_0, %c0_1] : memref<2x4x256xf32, #tpu.memory_space<vmem>>, vector<2x4x256xf32>
    %cst = arith.constant dense<0.000000e+00> : vector<2x4xf32>
    %1 = vector.multi_reduction <add>, %0, %cst [2] : vector<2x4x256xf32> to vector<2x4xf32>
    %cst_2 = arith.constant 2.560000e+02 : f32
    %2 = vector.broadcast %cst_2 : f32 to vector<2x4xf32>
    %3 = arith.divf %1, %2 : vector<2x4xf32>
    %c0_3 = arith.constant 0 : index
    %c0_4 = arith.constant 0 : index
    %4 = vector.load %arg2[%c0_3, %c0_4] : memref<4x32xf32, #tpu.memory_space<vmem>>, vector<4x32xf32>
    %cst_5 = arith.constant dense<0.000000e+00> : vector<2x32xf32>
    %5 = tpu.matmul %3, %4, %cst_5 {dimension_numbers = #tpu.dot_dimension_numbers<[1], [0], [0], [1], [0, 0, 1, 1], [], []>} : vector<2x4xf32>, vector<4x32xf32>, vector<2x32xf32> -> vector<2x32xf32>
    %c0_6 = arith.constant 0 : index
    %c0_7 = arith.constant 0 : index
    %6 = vector.load %arg3[%c0_6, %c0_7] : memref<1x32xf32, #tpu.memory_space<vmem>>, vector<1x32xf32>
    %7 = vector.broadcast %6 : vector<1x32xf32> to vector<2x32xf32>
    %8 = arith.addf %5, %7 : vector<2x32xf32>
    %cst_8 = arith.constant 0.000000e+00 : f32
    %9 = vector.broadcast %cst_8 : f32 to vector<2x32xf32>
    %10 = arith.maximumf %8, %9 : vector<2x32xf32>
    %c0_9 = arith.constant 0 : index
    %c0_10 = arith.constant 0 : index
    %11 = vector.load %arg4[%c0_9, %c0_10] : memref<32x4xf32, #tpu.memory_space<vmem>>, vector<32x4xf32>
    %cst_11 = arith.constant dense<0.000000e+00> : vector<2x4xf32>
    %12 = tpu.matmul %10, %11, %cst_11 {dimension_numbers = #tpu.dot_dimension_numbers<[1], [0], [0], [1], [0, 0, 1, 1], [], []>} : vector<2x32xf32>, vector<32x4xf32>, vector<2x4xf32> -> vector<2x4xf32>
    %c0_12 = arith.constant 0 : index
    %c0_13 = arith.constant 0 : index
    %13 = vector.load %arg5[%c0_12, %c0_13] : memref<1x4xf32, #tpu.memory_space<vmem>>, vector<1x4xf32>
    %14 = vector.broadcast %13 : vector<1x4xf32> to vector<2x4xf32>
    %15 = arith.addf %12, %14 : vector<2x4xf32>
    %cst_14 = arith.constant dense<0xFF800000> : vector<2xf32>
    %16 = vector.multi_reduction <maximumf>, %15, %cst_14 [1] : vector<2x4xf32> to vector<2xf32>
    %17 = vector.shape_cast %16 : vector<2xf32> to vector<2x1xf32>
    %18 = vector.broadcast %17 : vector<2x1xf32> to vector<2x4xf32>
    %19 = arith.subf %15, %18 : vector<2x4xf32>
    %20 = math.exp %19 : vector<2x4xf32>
    %cst_15 = arith.constant dense<0.000000e+00> : vector<2xf32>
    %21 = vector.multi_reduction <add>, %20, %cst_15 [1] : vector<2x4xf32> to vector<2xf32>
    %22 = vector.shape_cast %21 : vector<2xf32> to vector<2x1xf32>
    %23 = vector.broadcast %22 : vector<2x1xf32> to vector<2x4xf32>
    %24 = arith.divf %20, %23 : vector<2x4xf32>
    %c0_16 = arith.constant 0 : index
    %c0_17 = arith.constant 0 : index
    %25 = vector.load %arg6[%c0_16, %c0_17] : memref<2x4xf32, #tpu.memory_space<vmem>>, vector<2x4xf32>
    tpu.vector_store %arg6[%c0_16, %c0_17], %24 {strides = array<i32>} : memref<2x4xf32, #tpu.memory_space<vmem>>, vector<2x4xf32>,
    return
  }
  func.func @transform_0(%arg0: i32) -> (i32, i32, i32) {
    %c0_i32 = arith.constant 0 : i32
    %c0_i32_0 = arith.constant 0 : i32
    %c0_i32_1 = arith.constant 0 : i32
    %c0_i32_2 = arith.constant 0 : i32
    return %c0_i32, %c0_i32_0, %c0_i32_1 : i32, i32, i32
  }
  func.func @transform_1(%arg0: i32) -> (i32, i32) {
    %c0_i32 = arith.constant 0 : i32
    %c0_i32_0 = arith.constant 0 : i32
    %c0_i32_1 = arith.constant 0 : i32
    return %c0_i32, %c0_i32_0 : i32, i32
  }
  func.func @transform_2(%arg0: i32) -> (i32, i32) {
    %c0_i32 = arith.constant 0 : i32
    %c0_i32_0 = arith.constant 0 : i32
    %c0_i32_1 = arith.constant 0 : i32
    return %c0_i32, %c0_i32_0 : i32, i32
  }
  func.func @transform_3(%arg0: i32) -> (i32, i32) {
    %c0_i32 = arith.constant 0 : i32
    %c0_i32_0 = arith.constant 0 : i32
    %c0_i32_1 = arith.constant 0 : i32
    return %c0_i32, %c0_i32_0 : i32, i32
  }
  func.func @transform_4(%arg0: i32) -> (i32, i32) {
    %c0_i32 = arith.constant 0 : i32
    %c0_i32_0 = arith.constant 0 : i32
    %c0_i32_1 = arith.constant 0 : i32
    return %c0_i32, %c0_i32_0 : i32, i32
  }
  func.func @transform_5(%arg0: i32) -> (i32, i32) {
    %c0_i32 = arith.constant 0 : i32
    %c0_i32_0 = arith.constant 0 : i32
    %c0_i32_1 = arith.constant 0 : i32
    return %c0_i32, %c0_i32_0 : i32, i32
  }
}

module attributes {stable_mosaic.version = 11 : i64} {
  func.func @fused_kernel(%arg0: i32, %arg1: memref<2x4x128xf32, #tpu.memory_space<vmem>>, %arg2: memref<4x16x1xf32, #tpu.memory_space<vmem>>, %arg3: memref<1x16x1xf32, #tpu.memory_space<vmem>>, %arg4: memref<2x16x1xf32, #tpu.memory_space<vmem>>, %arg5: memref<2x4x128xf32, #tpu.memory_space<vmem>>) attributes {dimension_semantics = [#tpu.dimension_semantics<parallel>], iteration_bounds = array<i64: 2>, scalar_prefetch = 0 : i64, scratch_operands = 0 : i64, tpu.core_type = #tpu.core_type<tc>, window_params = [{transform_indices = @transform_0, window_bounds = array<i64: 2, 4, 128>}, {pipeline_mode = #tpu.pipeline_mode<synchronous>, transform_indices = @transform_1, window_bounds = array<i64: 4, 16, 1>}, {pipeline_mode = #tpu.pipeline_mode<synchronous>, transform_indices = @transform_2, window_bounds = array<i64: 1, 16, 1>}, {pipeline_mode = #tpu.pipeline_mode<synchronous>, transform_indices = @transform_3, window_bounds = array<i64: 2, 16, 1>}, {transform_indices = @transform_4, window_bounds = array<i64: 2, 4, 128>}]} {
    %c0 = arith.constant 0 : index
    %c0_0 = arith.constant 0 : index
    %c0_1 = arith.constant 0 : index
    %0 = vector.load %arg1[%c0, %c0_0, %c0_1] : memref<2x4x128xf32, #tpu.memory_space<vmem>>, vector<2x4x128xf32>
    %c0_2 = arith.constant 0 : index
    %c0_3 = arith.constant 0 : index
    %c0_4 = arith.constant 0 : index
    %1 = vector.load %arg3[%c0_2, %c0_3, %c0_4] : memref<1x16x1xf32, #tpu.memory_space<vmem>>, vector<1x16x1xf32>
    %c0_5 = arith.constant 0 : index
    %c0_6 = arith.constant 0 : index
    %c0_7 = arith.constant 0 : index
    %2 = vector.load %arg2[%c0_5, %c0_6, %c0_7] : memref<4x16x1xf32, #tpu.memory_space<vmem>>, vector<1x16x1xf32>
    %3 = vector.shape_cast %2 : vector<1x16x1xf32> to vector<16x1xf32>
    %4 = vector.shape_cast %3 : vector<16x1xf32> to vector<1x16x1xf32>
    %5 = vector.extract_strided_slice %0 {offsets = [0, 0, 0], sizes = [2, 1, 128], strides = [1, 1, 1]} : vector<2x4x128xf32> to vector<2x1x128xf32>
    %6 = vector.broadcast %4 : vector<1x16x1xf32> to vector<2x16x128xf32>
    %7 = vector.broadcast %5 : vector<2x1x128xf32> to vector<2x16x128xf32>
    %8 = arith.mulf %6, %7 : vector<2x16x128xf32>
    %9 = vector.broadcast %1 : vector<1x16x1xf32> to vector<2x16x128xf32>
    %10 = arith.addf %9, %8 : vector<2x16x128xf32>
    %c1 = arith.constant 1 : index
    %c0_8 = arith.constant 0 : index
    %c0_9 = arith.constant 0 : index
    %11 = vector.load %arg2[%c1, %c0_8, %c0_9] : memref<4x16x1xf32, #tpu.memory_space<vmem>>, vector<1x16x1xf32>
    %12 = vector.shape_cast %11 : vector<1x16x1xf32> to vector<16x1xf32>
    %13 = vector.shape_cast %12 : vector<16x1xf32> to vector<1x16x1xf32>
    %14 = vector.extract_strided_slice %0 {offsets = [0, 1, 0], sizes = [2, 1, 128], strides = [1, 1, 1]} : vector<2x4x128xf32> to vector<2x1x128xf32>
    %15 = vector.broadcast %13 : vector<1x16x1xf32> to vector<2x16x128xf32>
    %16 = vector.broadcast %14 : vector<2x1x128xf32> to vector<2x16x128xf32>
    %17 = arith.mulf %15, %16 : vector<2x16x128xf32>
    %18 = arith.addf %10, %17 : vector<2x16x128xf32>
    %c2 = arith.constant 2 : index
    %c0_10 = arith.constant 0 : index
    %c0_11 = arith.constant 0 : index
    %19 = vector.load %arg2[%c2, %c0_10, %c0_11] : memref<4x16x1xf32, #tpu.memory_space<vmem>>, vector<1x16x1xf32>
    %20 = vector.shape_cast %19 : vector<1x16x1xf32> to vector<16x1xf32>
    %21 = vector.shape_cast %20 : vector<16x1xf32> to vector<1x16x1xf32>
    %22 = vector.extract_strided_slice %0 {offsets = [0, 2, 0], sizes = [2, 1, 128], strides = [1, 1, 1]} : vector<2x4x128xf32> to vector<2x1x128xf32>
    %23 = vector.broadcast %21 : vector<1x16x1xf32> to vector<2x16x128xf32>
    %24 = vector.broadcast %22 : vector<2x1x128xf32> to vector<2x16x128xf32>
    %25 = arith.mulf %23, %24 : vector<2x16x128xf32>
    %26 = arith.addf %18, %25 : vector<2x16x128xf32>
    %c3 = arith.constant 3 : index
    %c0_12 = arith.constant 0 : index
    %c0_13 = arith.constant 0 : index
    %27 = vector.load %arg2[%c3, %c0_12, %c0_13] : memref<4x16x1xf32, #tpu.memory_space<vmem>>, vector<1x16x1xf32>
    %28 = vector.shape_cast %27 : vector<1x16x1xf32> to vector<16x1xf32>
    %29 = vector.shape_cast %28 : vector<16x1xf32> to vector<1x16x1xf32>
    %30 = vector.extract_strided_slice %0 {offsets = [0, 3, 0], sizes = [2, 1, 128], strides = [1, 1, 1]} : vector<2x4x128xf32> to vector<2x1x128xf32>
    %31 = vector.broadcast %29 : vector<1x16x1xf32> to vector<2x16x128xf32>
    %32 = vector.broadcast %30 : vector<2x1x128xf32> to vector<2x16x128xf32>
    %33 = arith.mulf %31, %32 : vector<2x16x128xf32>
    %34 = arith.addf %26, %33 : vector<2x16x128xf32>
    %35 = math.tanh %34 : vector<2x16x128xf32>
    %c0_14 = arith.constant 0 : index
    %c0_15 = arith.constant 0 : index
    %c0_16 = arith.constant 0 : index
    %36 = vector.load %arg4[%c0_14, %c0_15, %c0_16] : memref<2x16x1xf32, #tpu.memory_space<vmem>>, vector<2x16x1xf32>
    %37 = vector.broadcast %36 : vector<2x16x1xf32> to vector<2x16x128xf32>
    %38 = arith.mulf %35, %37 : vector<2x16x128xf32>
    %39 = vector.extract_strided_slice %38 {offsets = [0, 0, 0], sizes = [2, 8, 128], strides = [1, 1, 1]} : vector<2x16x128xf32> to vector<2x8x128xf32>
    %40 = vector.extract_strided_slice %38 {offsets = [0, 8, 0], sizes = [2, 8, 128], strides = [1, 1, 1]} : vector<2x16x128xf32> to vector<2x8x128xf32>
    %41 = arith.addf %39, %40 : vector<2x8x128xf32>
    %42 = vector.extract_strided_slice %41 {offsets = [0, 0, 0], sizes = [2, 4, 128], strides = [1, 1, 1]} : vector<2x8x128xf32> to vector<2x4x128xf32>
    %43 = vector.extract_strided_slice %41 {offsets = [0, 4, 0], sizes = [2, 4, 128], strides = [1, 1, 1]} : vector<2x8x128xf32> to vector<2x4x128xf32>
    %44 = arith.addf %42, %43 : vector<2x4x128xf32>
    %45 = arith.addf %0, %44 : vector<2x4x128xf32>
    %c0_17 = arith.constant 0 : index
    %c0_18 = arith.constant 0 : index
    %c0_19 = arith.constant 0 : index
    %46 = vector.load %arg5[%c0_17, %c0_18, %c0_19] : memref<2x4x128xf32, #tpu.memory_space<vmem>>, vector<2x4x128xf32>
    tpu.vector_store %arg5[%c0_17, %c0_18, %c0_19], %45 {strides = array<i32>} : memref<2x4x128xf32, #tpu.memory_space<vmem>>, vector<2x4x128xf32>,
    return
  }
  func.func @transform_0(%arg0: i32) -> (i32, i32, i32) {
    %c0_i32 = arith.constant 0 : i32
    %c0_i32_0 = arith.constant 0 : i32
    %c0_i32_1 = arith.constant 0 : i32
    return %c0_i32, %c0_i32_0, %arg0 : i32, i32, i32
  }
  func.func @transform_1(%arg0: i32) -> (i32, i32, i32) {
    %c0_i32 = arith.constant 0 : i32
    %c0_i32_0 = arith.constant 0 : i32
    %c0_i32_1 = arith.constant 0 : i32
    %c0_i32_2 = arith.constant 0 : i32
    return %c0_i32, %c0_i32_0, %c0_i32_1 : i32, i32, i32
  }
  func.func @transform_2(%arg0: i32) -> (i32, i32, i32) {
    %c0_i32 = arith.constant 0 : i32
    %c0_i32_0 = arith.constant 0 : i32
    %c0_i32_1 = arith.constant 0 : i32
    %c0_i32_2 = arith.constant 0 : i32
    return %c0_i32, %c0_i32_0, %c0_i32_1 : i32, i32, i32
  }
  func.func @transform_3(%arg0: i32) -> (i32, i32, i32) {
    %c0_i32 = arith.constant 0 : i32
    %c0_i32_0 = arith.constant 0 : i32
    %c0_i32_1 = arith.constant 0 : i32
    %c0_i32_2 = arith.constant 0 : i32
    return %c0_i32, %c0_i32_0, %c0_i32_1 : i32, i32, i32
  }
  func.func @transform_4(%arg0: i32) -> (i32, i32, i32) {
    %c0_i32 = arith.constant 0 : i32
    %c0_i32_0 = arith.constant 0 : i32
    %c0_i32_1 = arith.constant 0 : i32
    return %c0_i32, %c0_i32_0, %arg0 : i32, i32, i32
  }
}

</mosaic_0001>

<llo_original>
// kernel: model_combination_forward.3
$region0: #{model_combination_forward.3}
  #allocation0 [shape = 'u32[]', space=smem, size = 0x4, offset = 0x4, fixed_abs, tag = 'smem constant byte address 0x4 - core index']
  #allocation1 [shape = 'u32[144,128]{1,0:T(1,128)}', space=vmem, size = 0x12000, scoped, tag = 'internal scratch']
  %s0 = inlined_call_operand.vmem [shape: f32[2,4,256], index: 0, kind: input, shape index: {}]
  %s1 = inlined_call_operand.vmem [shape: f32[4,16,1], index: 1, kind: input, shape index: {}]
  %s2 = inlined_call_operand.vmem [shape: f32[1,16,1], index: 2, kind: input, shape index: {}]
  %s3 = inlined_call_operand.vmem [shape: f32[2,16,1], index: 3, kind: input, shape index: {}]
  %s4 = inlined_call_operand.vmem [shape: f32[2,4,256], index: 4, kind: output, shape index: {}]
  %s5 = sld [smem:[#allocation0]]
  $region127: #{model_combination_forward.3} parent=0
    _
  %s7 = ssub.s32 1, %s5
  %s8 = scalar_select 0, %s7, %s5
  $region1: #{model_combination_forward.3} parent=0
    #allocation2 [shape = 'u8[8192]{0}', space=vmem, size = 0x2000, scoped, tag = 'input window, operand 0']
    #allocation3 [shape = 'u8[8192]{0}', space=vmem, size = 0x2000, scoped, tag = 'output window, operand 0']
    loop: start=0, step=1, limit=4
    $region2: #{model_combination_forward.3} parent=1 // loop_pre_header
      _
    $region3: #{model_combination_forward.3} parent=1 // loop_header
      %s10 = sphi 0, %s14
      %p11 = scmp.ge.s32.totalorder %s10, 4
      %s20 = sphi 0, %s22
      %s23 = sphi 0, %s20
      %s24 = sphi 0, %s23
      %s40 = sphi 0, %s24
      %s44 = sphi 0, %s44
      %s46 = sphi 0, %s44
      %s47 = sphi 0, %s46
      %s61 = sphi 0, %s47
      %s65 = sphi 0, %s65
      %s67 = sphi 0, %s65
      %s68 = sphi 0, %s67
      %s82 = sphi 0, %s68
      %s86 = sphi 0, %s86
      %s88 = sphi 0, %s86
      %s89 = sphi 0, %s88
      %s103 = sphi 0, %s89
      %s109 = sphi 0, %s111
      %s112 = sphi 0, %s109
      %s113 = sphi 0, %s112
      %s129 = sphi 0, %s113
    $region4: #{model_combination_forward.3} parent=1 // loop_header_branch
      %13 = sbr.rel (%p11) target = $region8
    $region5: #{model_combination_forward.3} parent=1 // loop_body
      %s15 = ssub.s32 %s10, 1
      %s16 = ssub.s32 %s10, 2
      %s17 = sadd.s32 %s10, 1
      %s18 = ssub.s32 %s10, %s17
      %p19 = scmp.eq.s32.totalorder %s18, 0
      %s21 = sadd.s32 %s20, 1
      %s22 = scalar_select %p19, %s20, %s21
      %p25 = pneg %p19
      %p26 = scmp.eq.s32.totalorder %s10, 1
      %p27 = por %p25, %p26
      %p28 = scmp.ne.s32.totalorder %s20, %s23
      %p29 = scmp.eq.s32.totalorder %s10, 0
      %p30 = por %p28, %p29
      %p31 = scmp.ne.s32.totalorder %s20, %s23
      %p32 = scmp.eq.s32.totalorder %s15, 1
      %p33 = por %p31, %p32
      %p34 = scmp.ne.s32.totalorder %s23, %s24
      %p35 = scmp.eq.s32.totalorder %s15, 0
      %p36 = por %p34, %p35
      %p37 = scmp.ne.s32.totalorder %s23, %s24
      %p38 = scmp.eq.s32.totalorder %s16, 1
      %p39 = por %p37, %p38
      %p41 = scmp.ne.s32.totalorder %s24, %s40
      %p42 = scmp.eq.s32.totalorder %s16, 0
      %p43 = por %p41, %p42
      %s45 = sadd.s32 %s44, 1
      %p48 = scmp.eq.s32.totalorder %s10, 1
      %p49 = scmp.ne.s32.totalorder %s44, %s46
      %p50 = scmp.eq.s32.totalorder %s10, 0
      %p51 = por %p49, %p50
      %p52 = scmp.ne.s32.totalorder %s44, %s46
      %p53 = scmp.eq.s32.totalorder %s15, 1
      %p54 = por %p52, %p53
      %p55 = scmp.ne.s32.totalorder %s46, %s47
      %p56 = scmp.eq.s32.totalorder %s15, 0
      %p57 = por %p55, %p56
      %p58 = scmp.ne.s32.totalorder %s46, %s47
      %p59 = scmp.eq.s32.totalorder %s16, 1
      %p60 = por %p58, %p59
      %p62 = scmp.ne.s32.totalorder %s47, %s61
      %p63 = scmp.eq.s32.totalorder %s16, 0
      %p64 = por %p62, %p63
      %s66 = sadd.s32 %s65, 1
      %p69 = scmp.eq.s32.totalorder %s10, 1
      %p70 = scmp.ne.s32.totalorder %s65, %s67
      %p71 = scmp.eq.s32.totalorder %s10, 0
      %p72 = por %p70, %p71
      %p73 = scmp.ne.s32.totalorder %s65, %s67
      %p74 = scmp.eq.s32.totalorder %s15, 1
      %p75 = por %p73, %p74
      %p76 = scmp.ne.s32.totalorder %s67, %s68
      %p77 = scmp.eq.s32.totalorder %s15, 0
      %p78 = por %p76, %p77
      %p79 = scmp.ne.s32.totalorder %s67, %s68
      %p80 = scmp.eq.s32.totalorder %s16, 1
      %p81 = por %p79, %p80
      %p83 = scmp.ne.s32.totalorder %s68, %s82
      %p84 = scmp.eq.s32.totalorder %s16, 0
      %p85 = por %p83, %p84
      %s87 = sadd.s32 %s86, 1
      %p90 = scmp.eq.s32.totalorder %s10, 1
      %p91 = scmp.ne.s32.totalorder %s86, %s88
      %p92 = scmp.eq.s32.totalorder %s10, 0
      %p93 = por %p91, %p92
      %p94 = scmp.ne.s32.totalorder %s86, %s88
      %p95 = scmp.eq.s32.totalorder %s15, 1
      %p96 = por %p94, %p95
      %p97 = scmp.ne.s32.totalorder %s88, %s89
      %p98 = scmp.eq.s32.totalorder %s15, 0
      %p99 = por %p97, %p98
      %p100 = scmp.ne.s32.totalorder %s88, %s89
      %p101 = scmp.eq.s32.totalorder %s16, 1
      %p102 = por %p100, %p101
      %p104 = scmp.ne.s32.totalorder %s89, %s103
      %p105 = scmp.eq.s32.totalorder %s16, 0
      %p106 = por %p104, %p105
      %s107 = ssub.s32 %s10, %s17
      %p108 = scmp.eq.s32.totalorder %s107, 0
      %s110 = sadd.s32 %s109, 1
      %s111 = scalar_select %p108, %s109, %s110
      %p114 = pneg %p108
      %p115 = scmp.eq.s32.totalorder %s10, 1
      %p116 = por %p114, %p115
      %p117 = scmp.ne.s32.totalorder %s109, %s112
      %p118 = scmp.eq.s32.totalorder %s10, 0
      %p119 = por %p117, %p118
      %p120 = scmp.ne.s32.totalorder %s109, %s112
      %p121 = scmp.eq.s32.totalorder %s15, 1
      %p122 = por %p120, %p121
      %p123 = scmp.ne.s32.totalorder %s112, %s113
      %p124 = scmp.eq.s32.totalorder %s15, 0
      %p125 = por %p123, %p124
      %p126 = scmp.ne.s32.totalorder %s112, %s113
      %p127 = scmp.eq.s32.totalorder %s16, 1
      %p128 = por %p126, %p127
      %p130 = scmp.ne.s32.totalorder %s113, %s129
      %p131 = scmp.eq.s32.totalorder %s16, 0
      %p132 = por %p130, %p131
      %p133 = scmp.le.s32.totalorder 1, %s10
      %p134 = scmp.lt.s32.totalorder %s10, 3
      %p135 = pnand %p133, %p134
      %p136 = pneg %p135
      // Predicated region
      $region9: #{model_combination_forward.3} parent=5 // pred_check
        _
      $region10: #{model_combination_forward.3} parent=5 // pred_check_branch
        %138 = sbr.rel (%p135) target = $region12
      $region11: #{model_combination_forward.3} parent=5 // pred_region
        %s139 = ssub.s32 %s10, 1
        // Predicated region
        $region13: #{model_combination_forward.3} parent=11 // pred_check
          %p140 = pneg %p57
        $region14: #{model_combination_forward.3} parent=11 // pred_check_branch
          %142 = sbr.rel (%p140) target = $region16
        $region15: #{model_combination_forward.3} parent=11 // pred_region
          _
        $region16: #{model_combination_forward.3} parent=11 // pred_fallthru
          _
        // Predicated region
        $region17: #{model_combination_forward.3} parent=11 // pred_check
          %p143 = pneg %p78
        $region18: #{model_combination_forward.3} parent=11 // pred_check_branch
          %145 = sbr.rel (%p143) target = $region20
        $region19: #{model_combination_forward.3} parent=11 // pred_region
          _
        $region20: #{model_combination_forward.3} parent=11 // pred_fallthru
          _
        // Predicated region
        $region21: #{model_combination_forward.3} parent=11 // pred_check
          %p146 = pneg %p99
        $region22: #{model_combination_forward.3} parent=11 // pred_check_branch
          %148 = sbr.rel (%p146) target = $region24
        $region23: #{model_combination_forward.3} parent=11 // pred_region
          _
        $region24: #{model_combination_forward.3} parent=11 // pred_fallthru
          _
      $region12: #{model_combination_forward.3} parent=5 // pred_fallthru
        _
      %p149 = scmp.lt.s32.totalorder %s10, 2
      // Predicated region
      $region25: #{model_combination_forward.3} parent=5 // pred_check
        %p150 = pneg %p149
      $region26: #{model_combination_forward.3} parent=5 // pred_check_branch
        %152 = sbr.rel (%p150) target = $region28
      $region27: #{model_combination_forward.3} parent=5 // pred_region
        // Predicated region
        $region29: #{model_combination_forward.3} parent=27 // pred_check
          %p153 = pneg %p30
        $region30: #{model_combination_forward.3} parent=27 // pred_check_branch
          %155 = sbr.rel (%p153) target = $region32
        $region31: #{model_combination_forward.3} parent=27 // pred_region
          %s156 = sand.u32 %s20, 1
          %s157 = sand.u32 %s20, 1
          %s158 = smul.addr %s157, 8
          %s159 = scalar_lea.vmem [#allocation2], %s158
          %s160 = smul.addr %s10, 4
          %s161 = scalar_lea.vmem %s0, %s160
          // Predicated region
          $region33: #{model_combination_forward.3} parent=31 // pred_check
            _
          $region34: #{model_combination_forward.3} parent=31 // pred_check_branch
            %163 = sbr.rel (0) target = $region36
          $region35: #{model_combination_forward.3} parent=31 // pred_region
            // Predicated region
            $region37: #{model_combination_forward.3} parent=35 // pred_check
              _
            $region38: #{model_combination_forward.3} parent=35 // pred_check_branch
              %165 = sbr.rel target = $region40
            $region39: #{model_combination_forward.3} parent=35 // pred_region
              // Predicated region
              $region52: #{model_combination_forward.3} parent=39 // pred_check
                _
              $region53: #{model_combination_forward.3} parent=39 // pred_check_branch
                %183 = sbr.rel (0) target = $region55
              $region54: #{model_combination_forward.3} parent=39 // pred_region
                loop: start=0, step=1, limit=1
                $region56: #{model_combination_forward.3} parent=54 // loop_pre_header
                  _
                $region57: #{model_combination_forward.3} parent=54 // loop_header
                  %s185 = sphi 0, %s189
                  %p186 = scmp.ge.s32.totalorder %s185, 1
                  %s190 = sphi %s161, %s161
                  %s191 = sphi %s159, %s159
                $region58: #{model_combination_forward.3} parent=54 // loop_header_branch
                  %188 = sbr.rel (%p186) target = $region62
                $region59: #{model_combination_forward.3} parent=54 // loop_body
                  _
                $region60: #{model_combination_forward.3} parent=54 // loop_footer
                  %s189 = sadd.s32 1, %s185
                $region61: #{model_combination_forward.3} parent=54 // loop_footer_branch
                  %184 = sbr.rel target = $region57
                $region62: #{model_combination_forward.3} parent=54 // loop_exit
                  _
                %s193 = ssub.s32 16, 1
                loop: start=0, step=1, limit=1
                $region63: #{model_combination_forward.3} parent=54 // loop_pre_header
                  _
                $region64: #{model_combination_forward.3} parent=54 // loop_header
                  %s195 = sphi 0, %s199
                  %p196 = scmp.ge.s32.totalorder %s195, 1
                  %s200 = sphi %s161, %s161
                  %s201 = sphi %s159, %s159
                $region65: #{model_combination_forward.3} parent=54 // loop_header_branch
                  %198 = sbr.rel (%p196) target = $region69
                $region66: #{model_combination_forward.3} parent=54 // loop_body
                  %v202 = vld [vmem:[%s200] sm:%s193]
                  %203 = vst [vmem:[%s201] sm:%s193] %v202
                  %v204 = vld [vmem:[%s200 + $0x8] sm:%s193]
                  %205 = vst [vmem:[%s201 + $0x4] sm:%s193] %v204
                $region67: #{model_combination_forward.3} parent=54 // loop_footer
                  %s199 = sadd.s32 1, %s195
                $region68: #{model_combination_forward.3} parent=54 // loop_footer_branch
                  %194 = sbr.rel target = $region64
                $region69: #{model_combination_forward.3} parent=54 // loop_exit
                  _
              $region55: #{model_combination_forward.3} parent=39 // pred_fallthru
                _
            $region40: #{model_combination_forward.3} parent=35 // pred_fallthru
              _
            // Predicated region
            $region41: #{model_combination_forward.3} parent=35 // pred_check
              _
            $region42: #{model_combination_forward.3} parent=35 // pred_check_branch
              %167 = sbr.rel (0) target = $region44
            $region43: #{model_combination_forward.3} parent=35 // pred_region
              %s169 = ssub.s32 16, 1
              loop: start=0, step=1, limit=1
              $region45: #{model_combination_forward.3} parent=43 // loop_pre_header
                _
              $region46: #{model_combination_forward.3} parent=43 // loop_header
                %s171 = sphi 0, %s175
                %p172 = scmp.ge.s32.totalorder %s171, 1
                %s176 = sphi %s161, %s161
                %s177 = sphi %s159, %s159
              $region47: #{model_combination_forward.3} parent=43 // loop_header_branch
                %174 = sbr.rel (%p172) target = $region51
              $region48: #{model_combination_forward.3} parent=43 // loop_body
                %v178 = vld [vmem:[%s176] sm:%s169]
                %179 = vst [vmem:[%s177] sm:%s169] %v178
                %v180 = vld [vmem:[%s176 + $0x8] sm:%s169]
                %181 = vst [vmem:[%s177 + $0x4] sm:%s169] %v180
              $region49: #{model_combination_forward.3} parent=43 // loop_footer
                %s175 = sadd.s32 1, %s171
              $region50: #{model_combination_forward.3} parent=43 // loop_footer_branch
                %170 = sbr.rel target = $region46
              $region51: #{model_combination_forward.3} parent=43 // loop_exit
                _
            $region44: #{model_combination_forward.3} parent=35 // pred_fallthru
              _
          $region36: #{model_combination_forward.3} parent=31 // pred_fallthru
            _
          %206 = vnop
        $region32: #{model_combination_forward.3} parent=27 // pred_fallthru
          _
      $region28: #{model_combination_forward.3} parent=5 // pred_fallthru
        _
      %p207 = scmp.le.s32.totalorder 1, %s10
      %p208 = scmp.lt.s32.totalorder %s10, 3
      %p209 = pnand %p207, %p208
      %p210 = pneg %p209
      // Predicated region
      $region70: #{model_combination_forward.3} parent=5 // pred_check
        _
      $region71: #{model_combination_forward.3} parent=5 // pred_check_branch
        %212 = sbr.rel (%p209) target = $region73
      $region72: #{model_combination_forward.3} parent=5 // pred_region
        %s213 = ssub.s32 %s10, 1
        %s214 = sand.u32 %s23, 1
        %s215 = sand.u32 %s23, 1
        %s216 = smul.addr %s215, 8
        %s217 = scalar_lea.vmem [#allocation2], %s216
        // Predicated region
        $region74: #{model_combination_forward.3} parent=72 // pred_check
          %p218 = pneg %p36
        $region75: #{model_combination_forward.3} parent=72 // pred_check_branch
          %220 = sbr.rel (%p218) target = $region77
        $region76: #{model_combination_forward.3} parent=72 // pred_region
          _
        $region77: #{model_combination_forward.3} parent=72 // pred_fallthru
          _
        %s221 = sand.u32 %s23, 1
        %s222 = sand.u32 %s23, 1
        %s223 = smul.addr %s222, 8
        %s224 = scalar_lea.vmem [#allocation2], %s223
        %p225 = pneg %p36
        %p226 = pneg %p33
        %p227 = pneg %p57
        %p228 = pneg %p54
        %p229 = pneg %p78
        %p230 = pneg %p75
        %p231 = pneg %p99
        %p232 = pneg %p96
        %p233 = pneg %p125
        %p234 = pneg %p122
        %s235 = sand.u32 %s112, 1
        %s236 = sand.u32 %s112, 1
        %s237 = smul.addr %s236, 8
        %s238 = scalar_lea.vmem [#allocation3], %s237
        %v239 = vld [vmem:[%s217] sm:$0xf]
        %v240 = vld [vmem:[%s217 + $0x4] sm:$0xf]
        %v241 = vld [vmem:[%s2] sm:$0xff]
        %v242 = vld [vmem:[%s2 + $0x8] sm:$0xff]
        %v243 = vld [vmem:[%s1] sm:$0xff]
        %v244 = vld [vmem:[%s1 + $0x8] sm:$0xff]
        %246 = vset.pattern.permute.xlu0 0
        %247 = vperm.xlu0 %246, %v243
        %v248 = vpop.permute.xlu0 %247
        %251 = vset.pattern.permute.xlu0 0
        %252 = vperm.xlu0 %251, %v244
        %v253 = vpop.permute.xlu0 %252
        %v255 = vlaneseq
        %v256 = vshrl.u32 %v255, 7
        %v257 = vsub.s32 0, %v256
        %v258 = vrot.slane %v239, %v257
        %v259 = vlaneseq
        %v260 = vshrl.u32 %v259, 7
        %v261 = vsub.s32 0, %v260
        %v262 = vrot.slane %v240, %v261
        %v263 = vmul.f32 %v248, %v258
        %v264 = vmul.f32 %v253, %v258
        %v265 = vmul.f32 %v248, %v262
        %v266 = vmul.f32 %v253, %v262
        %268 = vset.pattern.permute.xlu0 0
        %269 = vperm.xlu0 %268, %v241
        %v270 = vpop.permute.xlu0 %269
        %273 = vset.pattern.permute.xlu0 0
        %274 = vperm.xlu0 %273, %v242
        %v275 = vpop.permute.xlu0 %274
        %v277 = vadd.f32 %v270, %v263
        %v278 = vadd.f32 %v275, %v264
        %v279 = vadd.f32 %v270, %v265
        %v280 = vadd.f32 %v275, %v266
        %s281 = scalar_lea.vmem %s1, 16
        %v282 = vld [vmem:[%s281] sm:$0xff]
        %v283 = vld [vmem:[%s281 + $0x8] sm:$0xff]
        %285 = vset.pattern.permute.xlu0 0
        %286 = vperm.xlu0 %285, %v282
        %v287 = vpop.permute.xlu0 %286
        %290 = vset.pattern.permute.xlu0 0
        %291 = vperm.xlu0 %290, %v283
        %v292 = vpop.permute.xlu0 %291
        %v294 = vlaneseq
        %v295 = vshrl.u32 %v294, 7
        %v296 = vsub.s32 1, %v295
        %v297 = vrot.slane %v239, %v296
        %v298 = vlaneseq
        %v299 = vshrl.u32 %v298, 7
        %v300 = vsub.s32 1, %v299
        %v301 = vrot.slane %v240, %v300
        %v302 = vmul.f32 %v287, %v297
        %v303 = vmul.f32 %v292, %v297
        %v304 = vmul.f32 %v287, %v301
        %v305 = vmul.f32 %v292, %v301
        %v306 = vadd.f32 %v277, %v302
        %v307 = vadd.f32 %v278, %v303
        %v308 = vadd.f32 %v279, %v304
        %v309 = vadd.f32 %v280, %v305
        %s310 = scalar_lea.vmem %s1, 32
        %v311 = vld [vmem:[%s310] sm:$0xff]
        %v312 = vld [vmem:[%s310 + $0x8] sm:$0xff]
        %314 = vset.pattern.permute.xlu0 0
        %315 = vperm.xlu0 %314, %v311
        %v316 = vpop.permute.xlu0 %315
        %319 = vset.pattern.permute.xlu0 0
        %320 = vperm.xlu0 %319, %v312
        %v321 = vpop.permute.xlu0 %320
        %v323 = vlaneseq
        %v324 = vshrl.u32 %v323, 7
        %v325 = vsub.s32 2, %v324
        %v326 = vrot.slane %v239, %v325
        %v327 = vlaneseq
        %v328 = vshrl.u32 %v327, 7
        %v329 = vsub.s32 2, %v328
        %v330 = vrot.slane %v240, %v329
        %v331 = vmul.f32 %v316, %v326
        %v332 = vmul.f32 %v321, %v326
        %v333 = vmul.f32 %v316, %v330
        %v334 = vmul.f32 %v321, %v330
        %v335 = vadd.f32 %v306, %v331
        %v336 = vadd.f32 %v307, %v332
        %v337 = vadd.f32 %v308, %v333
        %v338 = vadd.f32 %v309, %v334
        %s339 = scalar_lea.vmem %s1, 48
        %v340 = vld [vmem:[%s339] sm:$0xff]
        %v341 = vld [vmem:[%s339 + $0x8] sm:$0xff]
        %343 = vset.pattern.permute.xlu0 0
        %344 = vperm.xlu0 %343, %v340
        %v345 = vpop.permute.xlu0 %344
        %348 = vset.pattern.permute.xlu0 0
        %349 = vperm.xlu0 %348, %v341
        %v350 = vpop.permute.xlu0 %349
        %v352 = vlaneseq
        %v353 = vshrl.u32 %v352, 7
        %v354 = vsub.s32 3, %v353
        %v355 = vrot.slane %v239, %v354
        %v356 = vlaneseq
        %v357 = vshrl.u32 %v356, 7
        %v358 = vsub.s32 3, %v357
        %v359 = vrot.slane %v240, %v358
        %v360 = vmul.f32 %v345, %v355
        %v361 = vmul.f32 %v350, %v355
        %v362 = vmul.f32 %v345, %v359
        %v363 = vmul.f32 %v350, %v359
        %v364 = vadd.f32 %v335, %v360
        %v365 = vadd.f32 %v336, %v361
        %v366 = vadd.f32 %v337, %v362
        %v367 = vadd.f32 %v338, %v363
        %v368 = vtanh.pop %v364
        %v369 = vtanh.pop %v365
        %v370 = vtanh.pop %v366
        %v371 = vtanh.pop %v367
        %v372 = vld [vmem:[%s3] sm:$0xff]
        %v373 = vld [vmem:[%s3 + $0x8] sm:$0xff]
        %v374 = vld [vmem:[%s3 + $0x10] sm:$0xff]
        %v375 = vld [vmem:[%s3 + $0x18] sm:$0xff]
        %377 = vset.pattern.permute.xlu0 0
        %378 = vperm.xlu0 %377, %v372
        %v379 = vpop.permute.xlu0 %378
        %382 = vset.pattern.permute.xlu0 0
        %383 = vperm.xlu0 %382, %v373
        %v384 = vpop.permute.xlu0 %383
        %387 = vset.pattern.permute.xlu0 0
        %388 = vperm.xlu0 %387, %v374
        %v389 = vpop.permute.xlu0 %388
        %392 = vset.pattern.permute.xlu0 0
        %393 = vperm.xlu0 %392, %v375
        %v394 = vpop.permute.xlu0 %393
        %v396 = vmul.f32 %v368, %v379
        %v397 = vmul.f32 %v369, %v384
        %v398 = vmul.f32 %v370, %v389
        %v399 = vmul.f32 %v371, %v394
        %v400 = vadd.f32 %v396, %v397
        %v401 = vadd.f32 %v398, %v399
        %v404 = vrot.slane %v400, 4
        %v405 = vrot.slane %v401, 4
        %v408 = vadd.f32 %v400, %v404
        %v409 = vadd.f32 %v401, %v405
        %v410 = vadd.f32 %v239, %v408
        %v411 = vadd.f32 %v240, %v409
        %412 = vst [vmem:[%s238] sm:$0xf] %v410
        %413 = vst [vmem:[%s238 + $0x4] sm:$0xf] %v411
        %s414 = sand.u32 %s112, 1
        %s415 = sand.u32 %s112, 1
        %s416 = smul.addr %s415, 8
        %s417 = scalar_lea.vmem [#allocation3], %s416
        // Predicated region
        $region78: #{model_combination_forward.3} parent=72 // pred_check
          %p418 = pneg %p122
        $region79: #{model_combination_forward.3} parent=72 // pred_check_branch
          %420 = sbr.rel (%p418) target = $region81
        $region80: #{model_combination_forward.3} parent=72 // pred_region
          %s421 = smul.addr %s15, 4
          %s422 = scalar_lea.vmem %s4, %s421
          // Predicated region
          $region82: #{model_combination_forward.3} parent=80 // pred_check
            _
          $region83: #{model_combination_forward.3} parent=80 // pred_check_branch
            %424 = sbr.rel (0) target = $region85
          $region84: #{model_combination_forward.3} parent=80 // pred_region
            // Predicated region
            $region86: #{model_combination_forward.3} parent=84 // pred_check
              _
            $region87: #{model_combination_forward.3} parent=84 // pred_check_branch
              %426 = sbr.rel target = $region89
            $region88: #{model_combination_forward.3} parent=84 // pred_region
              // Predicated region
              $region101: #{model_combination_forward.3} parent=88 // pred_check
                _
              $region102: #{model_combination_forward.3} parent=88 // pred_check_branch
                %444 = sbr.rel (0) target = $region104
              $region103: #{model_combination_forward.3} parent=88 // pred_region
                loop: start=0, step=1, limit=1
                $region105: #{model_combination_forward.3} parent=103 // loop_pre_header
                  _
                $region106: #{model_combination_forward.3} parent=103 // loop_header
                  %s446 = sphi 0, %s450
                  %p447 = scmp.ge.s32.totalorder %s446, 1
                  %s451 = sphi %s417, %s417
                  %s452 = sphi %s422, %s422
                $region107: #{model_combination_forward.3} parent=103 // loop_header_branch
                  %449 = sbr.rel (%p447) target = $region111
                $region108: #{model_combination_forward.3} parent=103 // loop_body
                  _
                $region109: #{model_combination_forward.3} parent=103 // loop_footer
                  %s450 = sadd.s32 1, %s446
                $region110: #{model_combination_forward.3} parent=103 // loop_footer_branch
                  %445 = sbr.rel target = $region106
                $region111: #{model_combination_forward.3} parent=103 // loop_exit
                  _
                %s454 = ssub.s32 16, 1
                loop: start=0, step=1, limit=1
                $region112: #{model_combination_forward.3} parent=103 // loop_pre_header
                  _
                $region113: #{model_combination_forward.3} parent=103 // loop_header
                  %s456 = sphi 0, %s460
                  %p457 = scmp.ge.s32.totalorder %s456, 1
                  %s461 = sphi %s417, %s417
                  %s462 = sphi %s422, %s422
                $region114: #{model_combination_forward.3} parent=103 // loop_header_branch
                  %459 = sbr.rel (%p457) target = $region118
                $region115: #{model_combination_forward.3} parent=103 // loop_body
                  %v463 = vld [vmem:[%s461] sm:%s454]
                  %464 = vst [vmem:[%s462] sm:%s454] %v463
                  %v465 = vld [vmem:[%s461 + $0x4] sm:%s454]
                  %466 = vst [vmem:[%s462 + $0x8] sm:%s454] %v465
                $region116: #{model_combination_forward.3} parent=103 // loop_footer
                  %s460 = sadd.s32 1, %s456
                $region117: #{model_combination_forward.3} parent=103 // loop_footer_branch
                  %455 = sbr.rel target = $region113
                $region118: #{model_combination_forward.3} parent=103 // loop_exit
                  _
              $region104: #{model_combination_forward.3} parent=88 // pred_fallthru
                _
            $region89: #{model_combination_forward.3} parent=84 // pred_fallthru
              _
            // Predicated region
            $region90: #{model_combination_forward.3} parent=84 // pred_check
              _
            $region91: #{model_combination_forward.3} parent=84 // pred_check_branch
              %428 = sbr.rel (0) target = $region93
            $region92: #{model_combination_forward.3} parent=84 // pred_region
              %s430 = ssub.s32 16, 1
              loop: start=0, step=1, limit=1
              $region94: #{model_combination_forward.3} parent=92 // loop_pre_header
                _
              $region95: #{model_combination_forward.3} parent=92 // loop_header
                %s432 = sphi 0, %s436
                %p433 = scmp.ge.s32.totalorder %s432, 1
                %s437 = sphi %s417, %s417
                %s438 = sphi %s422, %s422
              $region96: #{model_combination_forward.3} parent=92 // loop_header_branch
                %435 = sbr.rel (%p433) target = $region100
              $region97: #{model_combination_forward.3} parent=92 // loop_body
                %v439 = vld [vmem:[%s437] sm:%s430]
                %440 = vst [vmem:[%s438] sm:%s430] %v439
                %v441 = vld [vmem:[%s437 + $0x4] sm:%s430]
                %442 = vst [vmem:[%s438 + $0x8] sm:%s430] %v441
              $region98: #{model_combination_forward.3} parent=92 // loop_footer
                %s436 = sadd.s32 1, %s432
              $region99: #{model_combination_forward.3} parent=92 // loop_footer_branch
                %431 = sbr.rel target = $region95
              $region100: #{model_combination_forward.3} parent=92 // loop_exit
                _
            $region93: #{model_combination_forward.3} parent=84 // pred_fallthru
              _
          $region85: #{model_combination_forward.3} parent=80 // pred_fallthru
            _
          %467 = vnop
        $region81: #{model_combination_forward.3} parent=72 // pred_fallthru
          _
      $region73: #{model_combination_forward.3} parent=5 // pred_fallthru
        _
      %p468 = scmp.le.s32.totalorder 2, %s10
      // Predicated region
      $region119: #{model_combination_forward.3} parent=5 // pred_check
        %p469 = pneg %p468
      $region120: #{model_combination_forward.3} parent=5 // pred_check_branch
        %471 = sbr.rel (%p469) target = $region122
      $region121: #{model_combination_forward.3} parent=5 // pred_region
        %s472 = ssub.s32 %s10, 2
        // Predicated region
        $region123: #{model_combination_forward.3} parent=121 // pred_check
          %p473 = pneg %p128
        $region124: #{model_combination_forward.3} parent=121 // pred_check_branch
          %475 = sbr.rel (%p473) target = $region126
        $region125: #{model_combination_forward.3} parent=121 // pred_region
          %s476 = sand.u32 %s113, 1
          %s477 = sand.u32 %s113, 1
          %s478 = smul.addr %s477, 8
          %s479 = scalar_lea.vmem [#allocation3], %s478
        $region126: #{model_combination_forward.3} parent=121 // pred_fallthru
          _
      $region122: #{model_combination_forward.3} parent=5 // pred_fallthru
        _
    $region6: #{model_combination_forward.3} parent=1 // loop_footer
      %s14 = sadd.s32 1, %s10
    $region7: #{model_combination_forward.3} parent=1 // loop_footer_branch
      %9 = sbr.rel target = $region3
    $region8: #{model_combination_forward.3} parent=1 // loop_exit
      _

// kernel: model_combination_forward.2
$region0: #{model_combination_forward.2}
  #allocation0 [shape = 'u32[]', space=smem, size = 0x4, offset = 0x4, fixed_abs, tag = 'smem constant byte address 0x4 - core index']
  #allocation1 [shape = 'u32[144,128]{1,0:T(1,128)}', space=vmem, size = 0x12000, scoped, tag = 'internal scratch']
  %s0 = inlined_call_operand.vmem [shape: f32[2,4,256], index: 0, kind: input, shape index: {}]
  %s1 = inlined_call_operand.vmem [shape: f32[4,32], index: 1, kind: input, shape index: {}]
  %s2 = inlined_call_operand.vmem [shape: f32[1,32], index: 2, kind: input, shape index: {}]
  %s3 = inlined_call_operand.vmem [shape: f32[32,4], index: 3, kind: input, shape index: {}]
  %s4 = inlined_call_operand.vmem [shape: f32[1,4], index: 4, kind: input, shape index: {}]
  %s5 = inlined_call_operand.vmem [shape: f32[2,4], index: 5, kind: output, shape index: {}]
  %s6 = sld [smem:[#allocation0]]
  $region30: #{model_combination_forward.2} parent=0
    _
  %s8 = ssub.s32 1, %s6
  %s9 = scalar_select 0, %s8, %s6
  // Predicated region
  $region2: #{model_combination_forward.2} parent=0 // pred_check
    _
  $region3: #{model_combination_forward.2} parent=0 // pred_check_branch
    %11 = sbr.rel (0) target = $region5
  $region4: #{model_combination_forward.2} parent=0 // pred_region
    _
  $region5: #{model_combination_forward.2} parent=0 // pred_fallthru
    _
  // Predicated region
  $region6: #{model_combination_forward.2} parent=0 // pred_check
    _
  $region7: #{model_combination_forward.2} parent=0 // pred_check_branch
    %13 = sbr.rel (0) target = $region9
  $region8: #{model_combination_forward.2} parent=0 // pred_region
    _
  $region9: #{model_combination_forward.2} parent=0 // pred_fallthru
    _
  // Predicated region
  $region10: #{model_combination_forward.2} parent=0 // pred_check
    _
  $region11: #{model_combination_forward.2} parent=0 // pred_check_branch
    %15 = sbr.rel (0) target = $region13
  $region12: #{model_combination_forward.2} parent=0 // pred_region
    _
  $region13: #{model_combination_forward.2} parent=0 // pred_fallthru
    _
  // Predicated region
  $region14: #{model_combination_forward.2} parent=0 // pred_check
    _
  $region15: #{model_combination_forward.2} parent=0 // pred_check_branch
    %17 = sbr.rel (0) target = $region17
  $region16: #{model_combination_forward.2} parent=0 // pred_region
    _
  $region17: #{model_combination_forward.2} parent=0 // pred_fallthru
    _
  // Predicated region
  $region18: #{model_combination_forward.2} parent=0 // pred_check
    _
  $region19: #{model_combination_forward.2} parent=0 // pred_check_branch
    %19 = sbr.rel (0) target = $region21
  $region20: #{model_combination_forward.2} parent=0 // pred_region
    _
  $region21: #{model_combination_forward.2} parent=0 // pred_fallthru
    _
  %v20 = vld [vmem:[%s0] sm:$0xff]
  %v21 = vld [vmem:[%s0 + $0x8] sm:$0xff]
  %v24 = vcombine.high %v20, %v20
  %v25 = vcombine.high %v21, %v21
  %vm28 = vcmask 1043456
  %v29 = vsel %vm28, %v20, 0.0
  %v30 = vsel %vm28, %v24, 0.0
  %v31 = vadd.f32 %v29, %v30
  %32 = vadd.xlane.f32.xlu0 %v31
  %v33 = vpop.xlane.xlu0 %32
  %v34 = vsel %vm28, %v21, 0.0
  %v35 = vsel %vm28, %v25, 0.0
  %v36 = vadd.f32 %v34, %v35
  %37 = vadd.xlane.f32.xlu0 %v36
  %v38 = vpop.xlane.xlu0 %37
  %v39 = vrcp.pop 256.0
  %v40 = vmul.f32 %v33, %v39
  %v41 = vmul.f32 %v38, %v39
  %v42 = vld [vmem:[%s1] sm:$0xf]
  %v43 = vld [vmem:[%s2] sm:$0x1]
  %v45 = vlaneseq
  %v46 = vshrl.u32 %v45, 7
  %v47 = vsub.s32 0, %v46
  %v48 = vrot.slane %v43, %v47
  %v52 = vlaneseq
  %v53 = vand.u32 %v52, 127
  %v54 = vlaneseq
  %v55 = vshrl.u32 %v54, 7
  %v56 = vsub.s32 %v53, %v55
  %v57 = vrot.slane %v40, %v56
  %v58 = vlaneseq
  %v59 = vshrl.u32 %v58, 7
  %v60 = vsub.s32 %v53, %v59
  %v61 = vrot.slane %v41, %v60
  %vm62 = vcmask 1041409
  %v63 = vsel %vm62, %v61, %v57
  %vm64 = vcmask 31744
  %v65 = vsel %vm64, %v63, 0
  %v68 = vsel %vm28, %v42, 0
  %70 = vmatprep.subr.mxu0 0.0
  %71 = vmatpush1.msra.mxu0 0.0
  %72 = vmatprep.subr.mxu0 0.0
  %73 = vmatpush1.msra.mxu0 0.0
  %74 = vmatprep.subr.mxu0 0.0
  %75 = vmatpush1.msra.mxu0 0.0
  %76 = vmatprep.subr.mxu0 0.0
  %77 = vmatpush1.msra.mxu0 0.0
  %78 = vmatprep.subr.mxu0 0.0
  %79 = vmatpush1.msra.mxu0 0.0
  %80 = vmatprep.subr.mxu0 0.0
  %81 = vmatpush1.msra.mxu0 0.0
  %82 = vmatprep.subr.mxu0 0.0
  %83 = vmatpush1.msra.mxu0 0.0
  %84 = vmatprep.subr.mxu0 0.0
  %85 = vmatpush1.msra.mxu0 0.0
  %86 = vmatprep.subr.mxu0 0.0
  %87 = vmatpush1.msra.mxu0 0.0
  %88 = vmatprep.subr.mxu0 0.0
  %89 = vmatpush1.msra.mxu0 0.0
  %90 = vmatprep.subr.mxu0 0.0
  %91 = vmatpush1.msra.mxu0 0.0
  %92 = vmatprep.subr.mxu0 0.0
  %93 = vmatpush1.msra.mxu0 0.0
  %94 = vmatprep.subr.mxu0 0.0
  %95 = vmatpush1.msra.mxu0 0.0
  %96 = vmatprep.subr.mxu0 0.0
  %97 = vmatpush1.msra.mxu0 0.0
  %98 = vmatprep.subr.mxu0 0.0
  %99 = vmatpush1.msra.mxu0 0.0
  %100 = vmatprep.subr.mxu0 0.0
  %101 = vmatpush1.msra.mxu0 %v68
  %102 = vmatprep.subr.mxu0 0.0
  %103 = vmatpush2.msra.mxu0 0.0
  %104 = vmatprep.subr.mxu0 0.0
  %105 = vmatpush2.msra.mxu0 0.0
  %106 = vmatprep.subr.mxu0 0.0
  %107 = vmatpush2.msra.mxu0 0.0
  %108 = vmatprep.subr.mxu0 0.0
  %109 = vmatpush2.msra.mxu0 0.0
  %110 = vmatprep.subr.mxu0 0.0
  %111 = vmatpush2.msra.mxu0 0.0
  %112 = vmatprep.subr.mxu0 0.0
  %113 = vmatpush2.msra.mxu0 0.0
  %114 = vmatprep.subr.mxu0 0.0
  %115 = vmatpush2.msra.mxu0 0.0
  %116 = vmatprep.subr.mxu0 0.0
  %117 = vmatpush2.msra.mxu0 0.0
  %118 = vmatprep.subr.mxu0 0.0
  %119 = vmatpush2.msra.mxu0 0.0
  %120 = vmatprep.subr.mxu0 0.0
  %121 = vmatpush2.msra.mxu0 0.0
  %122 = vmatprep.subr.mxu0 0.0
  %123 = vmatpush2.msra.mxu0 0.0
  %124 = vmatprep.subr.mxu0 0.0
  %125 = vmatpush2.msra.mxu0 0.0
  %126 = vmatprep.subr.mxu0 0.0
  %127 = vmatpush2.msra.mxu0 0.0
  %128 = vmatprep.subr.mxu0 0.0
  %129 = vmatpush2.msra.mxu0 0.0
  %130 = vmatprep.subr.mxu0 0.0
  %131 = vmatpush2.msra.mxu0 0.0
  %132 = vmatprep.subr.mxu0 0.0
  %133 = vmatpush2.msra.mxu0 0.0
  %134 = vmatprep.mubr.f32.mxu0 0.0
  %135 = vmatmul.mubr.f32.gmra.mxu0 %v65
  %v136 = vpop.f32.mrf.mxu0
  %v137 = vadd.f32 %v48, %v136
  %v138 = vpop.f32.mrf.mxu0
  %139 = vdwg.mxu0
  %v140 = vmax.f32 %v137, 0.0
  %v141 = vld [vmem:[%s3] sm:$0xff]
  %v142 = vld [vmem:[%s3 + $0x8] sm:$0xff]
  %v143 = vld [vmem:[%s3 + $0x10] sm:$0xff]
  %v144 = vld [vmem:[%s3 + $0x18] sm:$0xff]
  %v145 = vld [vmem:[%s4] sm:$0x1]
  %v147 = vlaneseq
  %v148 = vshrl.u32 %v147, 7
  %v149 = vsub.s32 0, %v148
  %v150 = vrot.slane %v145, %v149
  %vm152 = vcmask 261120
  %v154 = vsel %vm152, %v140, 0
  %156 = vmatprep.subr.mxu0 0.0
  %157 = vmatpush1.msra.mxu0 0.0
  %158 = vmatprep.subr.mxu0 0.0
  %159 = vmatpush1.msra.mxu0 0.0
  %160 = vmatprep.subr.mxu0 0.0
  %161 = vmatpush1.msra.mxu0 0.0
  %162 = vmatprep.subr.mxu0 0.0
  %163 = vmatpush1.msra.mxu0 0.0
  %164 = vmatprep.subr.mxu0 0.0
  %165 = vmatpush1.msra.mxu0 0.0
  %166 = vmatprep.subr.mxu0 0.0
  %167 = vmatpush1.msra.mxu0 0.0
  %168 = vmatprep.subr.mxu0 0.0
  %169 = vmatpush1.msra.mxu0 0.0
  %170 = vmatprep.subr.mxu0 0.0
  %171 = vmatpush1.msra.mxu0 0.0
  %172 = vmatprep.subr.mxu0 0.0
  %173 = vmatpush1.msra.mxu0 0.0
  %174 = vmatprep.subr.mxu0 0.0
  %175 = vmatpush1.msra.mxu0 0.0
  %176 = vmatprep.subr.mxu0 0.0
  %177 = vmatpush1.msra.mxu0 0.0
  %178 = vmatprep.subr.mxu0 0.0
  %179 = vmatpush1.msra.mxu0 0.0
  %180 = vmatprep.subr.mxu0 0.0
  %181 = vmatpush1.msra.mxu0 %v144
  %182 = vmatprep.subr.mxu0 0.0
  %183 = vmatpush1.msra.mxu0 %v143
  %184 = vmatprep.subr.mxu0 0.0
  %185 = vmatpush1.msra.mxu0 %v142
  %186 = vmatprep.subr.mxu0 0.0
  %187 = vmatpush1.msra.mxu0 %v141
  %188 = vmatprep.subr.mxu0 0.0
  %189 = vmatpush2.msra.mxu0 0.0
  %190 = vmatprep.subr.mxu0 0.0
  %191 = vmatpush2.msra.mxu0 0.0
  %192 = vmatprep.subr.mxu0 0.0
  %193 = vmatpush2.msra.mxu0 0.0
  %194 = vmatprep.subr.mxu0 0.0
  %195 = vmatpush2.msra.mxu0 0.0
  %196 = vmatprep.subr.mxu0 0.0
  %197 = vmatpush2.msra.mxu0 0.0
  %198 = vmatprep.subr.mxu0 0.0
  %199 = vmatpush2.msra.mxu0 0.0
  %200 = vmatprep.subr.mxu0 0.0
  %201 = vmatpush2.msra.mxu0 0.0
  %202 = vmatprep.subr.mxu0 0.0
  %203 = vmatpush2.msra.mxu0 0.0
  %204 = vmatprep.subr.mxu0 0.0
  %205 = vmatpush2.msra.mxu0 0.0
  %206 = vmatprep.subr.mxu0 0.0
  %207 = vmatpush2.msra.mxu0 0.0
  %208 = vmatprep.subr.mxu0 0.0
  %209 = vmatpush2.msra.mxu0 0.0
  %210 = vmatprep.subr.mxu0 0.0
  %211 = vmatpush2.msra.mxu0 0.0
  %212 = vmatprep.subr.mxu0 0.0
  %213 = vmatpush2.msra.mxu0 0.0
  %214 = vmatprep.subr.mxu0 0.0
  %215 = vmatpush2.msra.mxu0 0.0
  %216 = vmatprep.subr.mxu0 0.0
  %217 = vmatpush2.msra.mxu0 0.0
  %218 = vmatprep.subr.mxu0 0.0
  %219 = vmatpush2.msra.mxu0 0.0
  %220 = vmatprep.mubr.f32.mxu0 0.0
  %221 = vmatmul.mubr.f32.gmra.mxu0 %v154
  %v222 = vpop.f32.mrf.mxu0
  %v223 = vadd.f32 %v150, %v222
  %v224 = vpop.f32.mrf.mxu0
  %225 = vdwg.mxu0
  %vm226 = vcmask 25600
  %v227 = vsel %vm226, %v223, -inf
  %228 = vmax.xlane.f32.xlu0 %v227
  %v229 = vpop.xlane.xlu0 %228
  %v230 = vsub.f32 %v223, %v229
  %v231 = vmul.f32 %v230, 1.442695
  %v232 = vpow.pop %v231
  %v233 = vsel %vm226, %v232, 0.0
  %234 = vadd.xlane.f32.xlu0 %v233
  %v235 = vpop.xlane.xlu0 %234
  %v236 = vrcp.pop %v235
  %v237 = vmul.f32 %v232, %v236
  %238 = vst.msk [vmem:[%s5] sm:$0x3] %vm226, %v237
  // Predicated region
  $region22: #{model_combination_forward.2} parent=0 // pred_check
    _
  $region23: #{model_combination_forward.2} parent=0 // pred_check_branch
    %240 = sbr.rel (0) target = $region25
  $region24: #{model_combination_forward.2} parent=0 // pred_region
    _
  $region25: #{model_combination_forward.2} parent=0 // pred_fallthru
    _
  // Predicated region
  $region26: #{model_combination_forward.2} parent=0 // pred_check
    _
  $region27: #{model_combination_forward.2} parent=0 // pred_check_branch
    %242 = sbr.rel (0) target = $region29
  $region28: #{model_combination_forward.2} parent=0 // pred_region
    _
  $region29: #{model_combination_forward.2} parent=0 // pred_fallthru
    _

</llo_original>
